<compile_context>
chip_gen: v7x
topology: tpu7x:2x2x1
jax: 0.10.0
libtpu: 0.0.40
codegen_flags: <defaults>
</compile_context>

<pallas_src>
import jax
import jax.numpy as jnp
from jax.experimental import pallas as pl
from jax.experimental.pallas import tpu as pltpu

_LANE = 128      # lane width (last dim)
_SUBLANE = 8     # f32 sublane multiple (second-to-last dim)


def _round_up(x, m):
    return ((x + m - 1) // m) * m


# ----------------------------- Pallas kernels ------------------------------


def _resnet_fc_kernel_shortcut(x_ref, w1_ref, ws_ref, b1_ref, w2_ref, b2_ref,
                               o_ref):
    """relu(x@W1 + b1) -> @W2 + b2 ; projection shortcut x@Ws ; relu(sum)."""
    x = x_ref[...]
    xc = x.astype(w1_ref.dtype)                    # MXU compute dtype (bf16/f32)
    net = jnp.dot(xc, w1_ref[...], preferred_element_type=jnp.float32)
    net = jnp.maximum(net + b1_ref[...], 0.0)
    x_s = jnp.dot(xc, ws_ref[...], preferred_element_type=jnp.float32)
    dx = jnp.dot(net.astype(w2_ref.dtype), w2_ref[...],
                 preferred_element_type=jnp.float32)
    o_ref[...] = jnp.maximum(x_s + dx + b2_ref[...], 0.0).astype(o_ref.dtype)


def _resnet_fc_kernel_identity(x_ref, w1_ref, b1_ref, w2_ref, b2_ref, o_ref):
    """relu(x@W1 + b1) -> @W2 + b2 ; identity shortcut ; relu(sum)."""
    x = x_ref[...]
    xc = x.astype(w1_ref.dtype)
    net = jnp.dot(xc, w1_ref[...], preferred_element_type=jnp.float32)
    net = jnp.maximum(net + b1_ref[...], 0.0)
    dx = jnp.dot(net.astype(w2_ref.dtype), w2_ref[...],
                 preferred_element_type=jnp.float32)
    o_ref[...] = jnp.maximum(x.astype(jnp.float32) + dx + b2_ref[...],
                             0.0).astype(o_ref.dtype)


# ------------------------- one-time weight packing --------------------------


def prepare_resnet_block_fc_params(params, compute_dtype=jnp.bfloat16):
    """Pack weights ONCE (outside the per-call path).

    Pads hidden (and the projected output, when a shortcut exists) to 128
    lanes and casts matmul weights to the MXU compute dtype (bf16 default).
    Biases stay f32 (added to the f32 accumulator).
    """
    size_in, hidden = params["w1"].shape
    size_out = params["w2"].shape[1]
    has_shortcut = "ws" in params
    cdt = jnp.dtype(compute_dtype)

    hidden_p = _round_up(hidden, _LANE)
    # Lane-dense output only for the projection path (padding then lives in
    # Ws/W2/b2 for free).  The identity path keeps the native width so the
    # residual add of the unpadded x stays trivial.
    out_p = _round_up(size_out, _LANE) if has_shortcut else size_out

    def pad2(w, rows, cols):
        return jnp.pad(w.astype(cdt), ((0, rows - w.shape[0]),
                                       (0, cols - w.shape[1])))

    prepared = {
        "w1": pad2(params["w1"], size_in, hidden_p),
        "w2": pad2(params["w2"], hidden_p, out_p),
        "b1": jnp.pad(params["b1"].astype(jnp.float32),
                      (0, hidden_p - hidden)).reshape(1, hidden_p),
        "b2": jnp.pad(params["b2"].astype(jnp.float32),
                      (0, out_p - size_out)).reshape(1, out_p),
        "size_out": int(size_out),
    }
    if has_shortcut:
        prepared["ws"] = pad2(params["ws"], size_in, out_p)
    return prepared


# ------------------------------ Python wrapper ------------------------------


def _vmem_capacity_bytes():
    try:
        return int(pltpu.get_tpu_info().vmem_capacity_bytes)
    except Exception:
        return 64 << 20            # conservative fallback (v7x per-TC VMEM)


def resnet_block_fc(x, prepared, *, row_tile=1024):
    """ResnetBlockFC forward with a fused Pallas TPU kernel.

    x: (..., size_in);  prepared: output of prepare_resnet_block_fc_params.
    Output dtype follows x.dtype (pass bf16 x for a fully bf16 I/O path).
    """
    w1, w2 = prepared["w1"], prepared["w2"]
    b1, b2 = prepared["b1"], prepared["b2"]
    ws = prepared.get("ws")
    size_out = prepared["size_out"]
    has_shortcut = ws is not None

    size_in, hidden_p = w1.shape
    out_p = w2.shape[1]
    assert x.shape[-1] == size_in

    lead_shape = x.shape[:-1]
    out_dtype = x.dtype
    x2d = x.reshape(-1, size_in)
    n = x2d.shape[0]

    # ---- row tile: dtype-aware sublanes, VMEM budget, >=2 grid steps ----
    x_item = jnp.dtype(x2d.dtype).itemsize
    o_item = jnp.dtype(out_dtype).itemsize
    c_item = jnp.dtype(w1.dtype).itemsize
    sub = max(_SUBLANE, 32 // x_item)        # 8 (f32) / 16 (bf16) / 32 (int8)

    weights = (w1, w2, b1, b2) + ((ws,) if has_shortcut else ())
    weight_bytes = sum(int(a.size) * a.dtype.itemsize for a in weights)
    # TODO(synk): add a K-tiled fallback (grid=(rows, K), f32 accumulator,
    # "arbitrary" K axis) for weight sets that no longer fit v7x's 64 MiB VMEM.

    vmem_cap = (_vmem_capacity_bytes() * 3) // 4          # ~75% of physical
    per_row = (2 * size_in * x_item                       # 2-buffered x tile
               + 2 * out_p * o_item                       # 2-buffered out tile
               + 4 * (hidden_p + 2 * out_p + size_in)     # f32 temporaries
               + c_item * (hidden_p + size_in))           # compute-dtype casts
    budget = vmem_cap - weight_bytes - (2 << 20)
    tn_cap = max(sub, (budget // max(per_row, 1)) // sub * sub)

    tn = min(row_tile, _round_up(n, sub), tn_cap)
    tn = max(sub, (tn // sub) * sub)
    if pl.cdiv(n, tn) < 2 and n > sub:       # keep both v7x TensorCores busy
        tn = _round_up(pl.cdiv(n, 2), sub)
    grid = (pl.cdiv(n, tn),)                 # ragged tail block is clipped

    # ---- block specs: x/out streamed per row tile, weights resident (1 buf) ----
    resident = pl.Buffered(1)
    x_spec = pl.BlockSpec((tn, size_in), lambda i: (i, 0))
    w1_spec = pl.BlockSpec((size_in, hidden_p), lambda i: (0, 0),
                           pipeline_mode=resident)
    w2_spec = pl.BlockSpec((hidden_p, out_p), lambda i: (0, 0),
                           pipeline_mode=resident)
    b1_spec = pl.BlockSpec((1, hidden_p), lambda i: (0, 0),
                           pipeline_mode=resident)
    b2_spec = pl.BlockSpec((1, out_p), lambda i: (0, 0),
                           pipeline_mode=resident)
    o_spec = pl.BlockSpec((tn, out_p), lambda i: (i, 0))

    if has_shortcut:
        ws_spec = pl.BlockSpec((size_in, out_p), lambda i: (0, 0),
                               pipeline_mode=resident)
        kernel = _resnet_fc_kernel_shortcut
        in_specs = [x_spec, w1_spec, ws_spec, b1_spec, w2_spec, b2_spec]
        operands = (x2d, w1, ws, b1, w2, b2)
    else:
        kernel = _resnet_fc_kernel_identity
        in_specs = [x_spec, w1_spec, b1_spec, w2_spec, b2_spec]
        operands = (x2d, w1, b1, w2, b2)

    # ---- scheduler hint + VMEM limit ----
    flops = 2 * n * (size_in * hidden_p + hidden_p * out_p
                     + (size_in * out_p if has_shortcut else 0))
    bytes_accessed = int(n * size_in * x_item + weight_bytes
                         + n * out_p * o_item)
    cost = pl.CostEstimate(flops=int(flops), transcendentals=0,
                           bytes_accessed=bytes_accessed)
    vmem_limit = int(min(max(weight_bytes + tn * per_row + (4 << 20), 32 << 20),
                         vmem_cap))

    out2d = pl.pallas_call(
        kernel,
        out_shape=jax.ShapeDtypeStruct((n, out_p), out_dtype),
        grid_spec=pltpu.PrefetchScalarGridSpec(
            num_scalar_prefetch=0,
            grid=grid,
            in_specs=in_specs,
            out_specs=o_spec,
        ),
        compiler_params=pltpu.CompilerParams(
            dimension_semantics=("parallel",),
            vmem_limit_bytes=vmem_limit,
        ),
        cost_estimate=cost,
    )(*operands)

    if out_p != size_out:                     # drop the lane padding (if any)
        out2d = out2d[:, :size_out]
    return out2d.reshape(*lead_shape, size_out)


# --------------------------- parameter construction -------------------------


def init_resnet_block_fc_params(key, size_in, size_out=None, hidden_size=None,
                                dtype=jnp.float32):
    """Init matching the PyTorch module (nn.Linear default + zeroed fc2.weight).

    PyTorch nn.Linear weight is (out, in); we store the transpose (in, out).
    """
    if size_out is None:
        size_out = size_in
    if hidden_size is None:
        hidden_size = size_in

    k1, k2, k3, k4 = jax.random.split(key, 4)

    def uniform_linear(k, fan_in, shape):
        bound = 1.0 / jnp.sqrt(fan_in)
        return jax.random.uniform(k, shape, dtype, minval=-bound, maxval=bound)

    params = {
        "w1": uniform_linear(k1, size_in, (size_in, hidden_size)),
        "b1": uniform_linear(k2, size_in, (hidden_size,)),
        "w2": jnp.zeros((hidden_size, size_out), dtype),   # nn.init.zeros_
        "b2": uniform_linear(k3, hidden_size, (size_out,)),
    }
    if size_in != size_out:
        params["ws"] = uniform_linear(k4, size_in, (size_in, size_out))
    return params


def resnet_block_fc_ref(x, params):
    """Pure-JAX reference for correctness checking."""
    net = jax.nn.relu(x @ params["w1"] + params["b1"])
    dx = net @ params["w2"] + params["b2"]
    x_s = x @ params["ws"] if "ws" in params else x
    return jax.nn.relu(x_s + dx)


# ----------------------------------- main -----------------------------------

if __name__ == "__main__":
    key = jax.random.PRNGKey(0)
    kx, kx2, kp1, kp2, kw2 = jax.random.split(key, 5)

    # Case 1: projection shortcut (size_in != size_out), tiny shapes, f32.
    size_in, hidden, size_out = 32, 64, 48
    x = jax.random.normal(kx, (2, 8, size_in), jnp.float32)       # (..., 32)
    params = init_resnet_block_fc_params(kp1, size_in, size_out, hidden)
    # Variant with non-zero fc2 weight so the second MXU pass is numerically
    # exercised (forward semantics are the same function of the parameters).
    params_rnd = dict(params)
    params_rnd["w2"] = jax.random.normal(kw2, (hidden, size_out),
                                         jnp.float32) * 0.1

    prep_f32 = prepare_resnet_block_fc_params(params, compute_dtype=jnp.float32)
    out = jax.block_until_ready(resnet_block_fc(x, prep_f32))
    ref = resnet_block_fc_ref(x, params)
    assert out.shape == (2, 8, size_out)
    assert jnp.allclose(out, ref, atol=1e-4, rtol=1e-4)

    # Case 2: identity shortcut (size_in == size_out == hidden), f32.
    params_id = init_resnet_block_fc_params(kp2, size_in)
    prep_id = prepare_resnet_block_fc_params(params_id, compute_dtype=jnp.float32)
    out_id = jax.block_until_ready(resnet_block_fc(x, prep_id))
    ref_id = resnet_block_fc_ref(x, params_id)
    assert out_id.shape == x.shape
    assert jnp.allclose(out_id, ref_id, atol=1e-4, rtol=1e-4)

    # Case 3: ragged N (clipped tail tile, 2-step parallel grid), non-zero fc2.
    x_big = jax.random.normal(kx2, (3, 450, size_in), jnp.float32)  # N = 1350
    prep_rnd_f32 = prepare_resnet_block_fc_params(params_rnd,
                                                  compute_dtype=jnp.float32)
    out_big = jax.block_until_ready(resnet_block_fc(x_big, prep_rnd_f32))
    ref_big = resnet_block_fc_ref(x_big, params_rnd)
    assert out_big.shape == (3, 450, size_out)
    assert jnp.allclose(out_big, ref_big, atol=1e-4, rtol=1e-4)

    # Case 4: default bf16 weight path (MXU-native), f32 x/out, loose tol.
    prep_bf16 = prepare_resnet_block_fc_params(params_rnd)   # bf16 by default
    out_bf16 = jax.block_until_ready(resnet_block_fc(x_big, prep_bf16))
    assert out_bf16.shape == (3, 450, size_out)
    assert jnp.allclose(out_bf16, ref_big, atol=5e-2, rtol=5e-2)

    # Case 5: fully bf16 I/O (bf16 x -> bf16 out, 16-row sublane tiles).
    x_bf16 = x_big.astype(jnp.bfloat16)
    out_io_bf16 = jax.block_until_ready(resnet_block_fc(x_bf16, prep_bf16))
    assert out_io_bf16.dtype == jnp.bfloat16
    assert out_io_bf16.shape == (3, 450, size_out)
    assert jnp.allclose(out_io_bf16.astype(jnp.float32), ref_big,
                        atol=1e-1, rtol=1e-1)

    print("KERNEL_OK")
</pallas_src>

<mosaic_0001>
module attributes {stable_mosaic.version = 11 : i64} {
  func.func @_resnet_fc_kernel_shortcut(%arg0: i32, %arg1: memref<8x32xf32, #tpu.memory_space<vmem>>, %arg2: memref<32x128xf32, #tpu.memory_space<vmem>>, %arg3: memref<32x128xf32, #tpu.memory_space<vmem>>, %arg4: memref<1x128xf32, #tpu.memory_space<vmem>>, %arg5: memref<128x128xf32, #tpu.memory_space<vmem>>, %arg6: memref<1x128xf32, #tpu.memory_space<vmem>>, %arg7: memref<8x128xf32, #tpu.memory_space<vmem>>) attributes {dimension_semantics = [#tpu.dimension_semantics<parallel>], iteration_bounds = array<i64: 2>, scalar_prefetch = 0 : i64, scratch_operands = 0 : i64, tpu.core_type = #tpu.core_type<tc>, window_params = [{transform_indices = @transform_0, window_bounds = array<i64: 8, 32>}, {pipeline_mode = #tpu.pipeline_mode<synchronous>, transform_indices = @transform_1, window_bounds = array<i64: 32, 128>}, {pipeline_mode = #tpu.pipeline_mode<synchronous>, transform_indices = @transform_2, window_bounds = array<i64: 32, 128>}, {pipeline_mode = #tpu.pipeline_mode<synchronous>, transform_indices = @transform_3, window_bounds = array<i64: 1, 128>}, {pipeline_mode = #tpu.pipeline_mode<synchronous>, transform_indices = @transform_4, window_bounds = array<i64: 128, 128>}, {pipeline_mode = #tpu.pipeline_mode<synchronous>, transform_indices = @transform_5, window_bounds = array<i64: 1, 128>}, {transform_indices = @transform_6, window_bounds = array<i64: 8, 128>}]} {
    %c0 = arith.constant 0 : index
    %c0_0 = arith.constant 0 : index
    %0 = vector.load %arg1[%c0, %c0_0] : memref<8x32xf32, #tpu.memory_space<vmem>>, vector<8x32xf32>
    %c0_1 = arith.constant 0 : index
    %c0_2 = arith.constant 0 : index
    %1 = vector.load %arg2[%c0_1, %c0_2] : memref<32x128xf32, #tpu.memory_space<vmem>>, vector<32x128xf32>
    %cst = arith.constant dense<0.000000e+00> : vector<8x128xf32>
    %2 = tpu.matmul %0, %1, %cst {dimension_numbers = #tpu.dot_dimension_numbers<[1], [0], [0], [1], [0, 0, 1, 1], [], []>} : vector<8x32xf32>, vector<32x128xf32>, vector<8x128xf32> -> vector<8x128xf32>
    %c0_3 = arith.constant 0 : index
    %c0_4 = arith.constant 0 : index
    %3 = vector.load %arg4[%c0_3, %c0_4] : memref<1x128xf32, #tpu.memory_space<vmem>>, vector<1x128xf32>
    %4 = vector.broadcast %3 : vector<1x128xf32> to vector<8x128xf32>
    %5 = arith.addf %2, %4 : vector<8x128xf32>
    %cst_5 = arith.constant 0.000000e+00 : f32
    %6 = vector.broadcast %cst_5 : f32 to vector<8x128xf32>
    %7 = arith.maximumf %5, %6 : vector<8x128xf32>
    %c0_6 = arith.constant 0 : index
    %c0_7 = arith.constant 0 : index
    %8 = vector.load %arg3[%c0_6, %c0_7] : memref<32x128xf32, #tpu.memory_space<vmem>>, vector<32x128xf32>
    %cst_8 = arith.constant dense<0.000000e+00> : vector<8x128xf32>
    %9 = tpu.matmul %0, %8, %cst_8 {dimension_numbers = #tpu.dot_dimension_numbers<[1], [0], [0], [1], [0, 0, 1, 1], [], []>} : vector<8x32xf32>, vector<32x128xf32>, vector<8x128xf32> -> vector<8x128xf32>
    %c0_9 = arith.constant 0 : index
    %c0_10 = arith.constant 0 : index
    %10 = vector.load %arg5[%c0_9, %c0_10] : memref<128x128xf32, #tpu.memory_space<vmem>>, vector<128x128xf32>
    %cst_11 = arith.constant dense<0.000000e+00> : vector<8x128xf32>
    %11 = tpu.matmul %7, %10, %cst_11 {dimension_numbers = #tpu.dot_dimension_numbers<[1], [0], [0], [1], [0, 0, 1, 1], [], []>} : vector<8x128xf32>, vector<128x128xf32>, vector<8x128xf32> -> vector<8x128xf32>
    %12 = arith.addf %9, %11 : vector<8x128xf32>
    %c0_12 = arith.constant 0 : index
    %c0_13 = arith.constant 0 : index
    %13 = vector.load %arg6[%c0_12, %c0_13] : memref<1x128xf32, #tpu.memory_space<vmem>>, vector<1x128xf32>
    %14 = vector.broadcast %13 : vector<1x128xf32> to vector<8x128xf32>
    %15 = arith.addf %12, %14 : vector<8x128xf32>
    %cst_14 = arith.constant 0.000000e+00 : f32
    %16 = vector.broadcast %cst_14 : f32 to vector<8x128xf32>
    %17 = arith.maximumf %15, %16 : vector<8x128xf32>
    %c0_15 = arith.constant 0 : index
    %c0_16 = arith.constant 0 : index
    %18 = vector.load %arg7[%c0_15, %c0_16] : memref<8x128xf32, #tpu.memory_space<vmem>>, vector<8x128xf32>
    tpu.vector_store %arg7[%c0_15, %c0_16], %17 {strides = array<i32>} : memref<8x128xf32, #tpu.memory_space<vmem>>, vector<8x128xf32>,
    return
  }
  func.func @transform_0(%arg0: i32) -> (i32, i32) {
    %c0_i32 = arith.constant 0 : i32
    %c0_i32_0 = arith.constant 0 : i32
    return %arg0, %c0_i32 : i32, i32
  }
  func.func @transform_1(%arg0: i32) -> (i32, i32) {
    %c0_i32 = arith.constant 0 : i32
    %c0_i32_0 = arith.constant 0 : i32
    %c0_i32_1 = arith.constant 0 : i32
    return %c0_i32, %c0_i32_0 : i32, i32
  }
  func.func @transform_2(%arg0: i32) -> (i32, i32) {
    %c0_i32 = arith.constant 0 : i32
    %c0_i32_0 = arith.constant 0 : i32
    %c0_i32_1 = arith.constant 0 : i32
    return %c0_i32, %c0_i32_0 : i32, i32
  }
  func.func @transform_3(%arg0: i32) -> (i32, i32) {
    %c0_i32 = arith.constant 0 : i32
    %c0_i32_0 = arith.constant 0 : i32
    %c0_i32_1 = arith.constant 0 : i32
    return %c0_i32, %c0_i32_0 : i32, i32
  }
  func.func @transform_4(%arg0: i32) -> (i32, i32) {
    %c0_i32 = arith.constant 0 : i32
    %c0_i32_0 = arith.constant 0 : i32
    %c0_i32_1 = arith.constant 0 : i32
    return %c0_i32, %c0_i32_0 : i32, i32
  }
  func.func @transform_5(%arg0: i32) -> (i32, i32) {
    %c0_i32 = arith.constant 0 : i32
    %c0_i32_0 = arith.constant 0 : i32
    %c0_i32_1 = arith.constant 0 : i32
    return %c0_i32, %c0_i32_0 : i32, i32
  }
  func.func @transform_6(%arg0: i32) -> (i32, i32) {
    %c0_i32 = arith.constant 0 : i32
    %c0_i32_0 = arith.constant 0 : i32
    return %arg0, %c0_i32 : i32, i32
  }
}

</mosaic_0001>

<llo_original>
// kernel: tpu_custom_call.1
$region0: #{tpu_custom_call.1}
  #allocation0 [shape = 'u32[]', space=smem, size = 0x4, offset = 0x4, fixed_abs, tag = 'smem constant byte address 0x4 - core index']
  #allocation1 [shape = 'u32[144,128]{1,0:T(1,128)}', space=vmem, size = 0x12000, scoped, tag = 'internal scratch']
  %s0 = inlined_call_operand.hbm [shape: f32[16,32], index: 0, kind: input, shape index: {}]
  %s1 = inlined_call_operand.hbm [shape: f32[32,128], index: 1, kind: input, shape index: {}]
  %s2 = inlined_call_operand.hbm [shape: f32[32,128], index: 2, kind: input, shape index: {}]
  %s3 = inlined_call_operand.vmem [shape: f32[1,128], index: 3, kind: input, shape index: {}]
  %s4 = inlined_call_operand.hbm [shape: f32[128,128], index: 4, kind: input, shape index: {}]
  %s5 = inlined_call_operand.vmem [shape: f32[1,128], index: 5, kind: input, shape index: {}]
  %s6 = inlined_call_operand.hbm [shape: f32[16,128], index: 6, kind: output, shape index: {}]
  %s7 = sld [smem:[#allocation0]]
  $region73: #{tpu_custom_call.1} parent=0
    _
  %s9 = ssub.s32 1, %s7
  %s10 = scalar_select 0, %s9, %s7
  $region1: #{tpu_custom_call.1} parent=0
    #allocation2 [shape = 'u8[8192]{0}', space=vmem, size = 0x2000, scoped, tag = 'input window, operand 0']
    #allocation3 [shape = 's32[2]{0}', space=sflag, size = 0x8, scoped, tag = 'scoped memory for tpu_custom_call.1']
    #allocation4 [shape = 's32[2]{0}', space=sflag, size = 0x8, scoped, tag = 'scoped memory for tpu_custom_call.1']
    #allocation5 [shape = 'u8[16384]{0}', space=vmem, size = 0x4000, scoped, tag = 'input window, operand 1, single buffered']
    #allocation6 [shape = 's32[1]{0}', space=sflag, size = 0x4, scoped, tag = 'scoped memory for tpu_custom_call.1']
    #allocation7 [shape = 'u8[16384]{0}', space=vmem, size = 0x4000, scoped, tag = 'input window, operand 2, single buffered']
    #allocation8 [shape = 'u8[65536]{0}', space=vmem, size = 0x10000, scoped, tag = 'input window, operand 4, single buffered']
    #allocation9 [shape = 's32[1]{0}', space=sflag, size = 0x4, scoped, tag = 'scoped memory for tpu_custom_call.1']
    #allocation10 [shape = 'u8[8192]{0}', space=vmem, size = 0x2000, scoped, tag = 'output window, operand 0']
    %11 = vsyncpa [#allocation3], 0
    %s12 = scalar_lea.sflag [#allocation3], 1
    %13 = vsyncpa %s12, 0
    %14 = vsyncpa [#allocation6], 0
    %15 = vsyncpa [#allocation9], 0
    %16 = vsyncpa [#allocation4], 0
    %s17 = scalar_lea.sflag [#allocation4], 1
    %18 = vsyncpa %s17, 0
    loop: start=0, step=1, limit=4
    $region2: #{tpu_custom_call.1} parent=1 // loop_pre_header
      _
    $region3: #{tpu_custom_call.1} parent=1 // loop_header
      %s20 = sphi 0, %s24
      %p21 = scmp.ge.s32.totalorder %s20, 4
      %s30 = sphi 0, %s32
      %s33 = sphi 0, %s30
      %s34 = sphi 0, %s33
      %s50 = sphi 0, %s34
      %s54 = sphi 0, %s54
      %s56 = sphi 0, %s54
      %s57 = sphi 0, %s56
      %s71 = sphi 0, %s57
      %s75 = sphi 0, %s75
      %s77 = sphi 0, %s75
      %s78 = sphi 0, %s77
      %s92 = sphi 0, %s78
      %s96 = sphi 0, %s96
      %s98 = sphi 0, %s96
      %s99 = sphi 0, %s98
      %s113 = sphi 0, %s99
      %s117 = sphi 0, %s117
      %s119 = sphi 0, %s117
      %s120 = sphi 0, %s119
      %s134 = sphi 0, %s120
      %s138 = sphi 0, %s138
      %s140 = sphi 0, %s138
      %s141 = sphi 0, %s140
      %s155 = sphi 0, %s141
      %s161 = sphi 0, %s163
      %s164 = sphi 0, %s161
      %s165 = sphi 0, %s164
      %s181 = sphi 0, %s165
    $region4: #{tpu_custom_call.1} parent=1 // loop_header_branch
      %23 = sbr.rel (%p21) target = $region8
    $region5: #{tpu_custom_call.1} parent=1 // loop_body
      %s25 = ssub.s32 %s20, 1
      %s26 = ssub.s32 %s20, 2
      %s27 = sadd.s32 %s20, 1
      %s28 = ssub.s32 %s20, %s27
      %p29 = scmp.eq.s32.totalorder %s28, 0
      %s31 = sadd.s32 %s30, 1
      %s32 = scalar_select %p29, %s30, %s31
      %p35 = pneg %p29
      %p36 = scmp.eq.s32.totalorder %s20, 1
      %p37 = por %p35, %p36
      %p38 = scmp.ne.s32.totalorder %s30, %s33
      %p39 = scmp.eq.s32.totalorder %s20, 0
      %p40 = por %p38, %p39
      %p41 = scmp.ne.s32.totalorder %s30, %s33
      %p42 = scmp.eq.s32.totalorder %s25, 1
      %p43 = por %p41, %p42
      %p44 = scmp.ne.s32.totalorder %s33, %s34
      %p45 = scmp.eq.s32.totalorder %s25, 0
      %p46 = por %p44, %p45
      %p47 = scmp.ne.s32.totalorder %s33, %s34
      %p48 = scmp.eq.s32.totalorder %s26, 1
      %p49 = por %p47, %p48
      %p51 = scmp.ne.s32.totalorder %s34, %s50
      %p52 = scmp.eq.s32.totalorder %s26, 0
      %p53 = por %p51, %p52
      %s55 = sadd.s32 %s54, 1
      %p58 = scmp.eq.s32.totalorder %s20, 1
      %p59 = scmp.ne.s32.totalorder %s54, %s56
      %p60 = scmp.eq.s32.totalorder %s20, 0
      %p61 = por %p59, %p60
      %p62 = scmp.ne.s32.totalorder %s54, %s56
      %p63 = scmp.eq.s32.totalorder %s25, 1
      %p64 = por %p62, %p63
      %p65 = scmp.ne.s32.totalorder %s56, %s57
      %p66 = scmp.eq.s32.totalorder %s25, 0
      %p67 = por %p65, %p66
      %p68 = scmp.ne.s32.totalorder %s56, %s57
      %p69 = scmp.eq.s32.totalorder %s26, 1
      %p70 = por %p68, %p69
      %p72 = scmp.ne.s32.totalorder %s57, %s71
      %p73 = scmp.eq.s32.totalorder %s26, 0
      %p74 = por %p72, %p73
      %s76 = sadd.s32 %s75, 1
      %p79 = scmp.eq.s32.totalorder %s20, 1
      %p80 = scmp.ne.s32.totalorder %s75, %s77
      %p81 = scmp.eq.s32.totalorder %s20, 0
      %p82 = por %p80, %p81
      %p83 = scmp.ne.s32.totalorder %s75, %s77
      %p84 = scmp.eq.s32.totalorder %s25, 1
      %p85 = por %p83, %p84
      %p86 = scmp.ne.s32.totalorder %s77, %s78
      %p87 = scmp.eq.s32.totalorder %s25, 0
      %p88 = por %p86, %p87
      %p89 = scmp.ne.s32.totalorder %s77, %s78
      %p90 = scmp.eq.s32.totalorder %s26, 1
      %p91 = por %p89, %p90
      %p93 = scmp.ne.s32.totalorder %s78, %s92
      %p94 = scmp.eq.s32.totalorder %s26, 0
      %p95 = por %p93, %p94
      %s97 = sadd.s32 %s96, 1
      %p100 = scmp.eq.s32.totalorder %s20, 1
      %p101 = scmp.ne.s32.totalorder %s96, %s98
      %p102 = scmp.eq.s32.totalorder %s20, 0
      %p103 = por %p101, %p102
      %p104 = scmp.ne.s32.totalorder %s96, %s98
      %p105 = scmp.eq.s32.totalorder %s25, 1
      %p106 = por %p104, %p105
      %p107 = scmp.ne.s32.totalorder %s98, %s99
      %p108 = scmp.eq.s32.totalorder %s25, 0
      %p109 = por %p107, %p108
      %p110 = scmp.ne.s32.totalorder %s98, %s99
      %p111 = scmp.eq.s32.totalorder %s26, 1
      %p112 = por %p110, %p111
      %p114 = scmp.ne.s32.totalorder %s99, %s113
      %p115 = scmp.eq.s32.totalorder %s26, 0
      %p116 = por %p114, %p115
      %s118 = sadd.s32 %s117, 1
      %p121 = scmp.eq.s32.totalorder %s20, 1
      %p122 = scmp.ne.s32.totalorder %s117, %s119
      %p123 = scmp.eq.s32.totalorder %s20, 0
      %p124 = por %p122, %p123
      %p125 = scmp.ne.s32.totalorder %s117, %s119
      %p126 = scmp.eq.s32.totalorder %s25, 1
      %p127 = por %p125, %p126
      %p128 = scmp.ne.s32.totalorder %s119, %s120
      %p129 = scmp.eq.s32.totalorder %s25, 0
      %p130 = por %p128, %p129
      %p131 = scmp.ne.s32.totalorder %s119, %s120
      %p132 = scmp.eq.s32.totalorder %s26, 1
      %p133 = por %p131, %p132
      %p135 = scmp.ne.s32.totalorder %s120, %s134
      %p136 = scmp.eq.s32.totalorder %s26, 0
      %p137 = por %p135, %p136
      %s139 = sadd.s32 %s138, 1
      %p142 = scmp.eq.s32.totalorder %s20, 1
      %p143 = scmp.ne.s32.totalorder %s138, %s140
      %p144 = scmp.eq.s32.totalorder %s20, 0
      %p145 = por %p143, %p144
      %p146 = scmp.ne.s32.totalorder %s138, %s140
      %p147 = scmp.eq.s32.totalorder %s25, 1
      %p148 = por %p146, %p147
      %p149 = scmp.ne.s32.totalorder %s140, %s141
      %p150 = scmp.eq.s32.totalorder %s25, 0
      %p151 = por %p149, %p150
      %p152 = scmp.ne.s32.totalorder %s140, %s141
      %p153 = scmp.eq.s32.totalorder %s26, 1
      %p154 = por %p152, %p153
      %p156 = scmp.ne.s32.totalorder %s141, %s155
      %p157 = scmp.eq.s32.totalorder %s26, 0
      %p158 = por %p156, %p157
      %s159 = ssub.s32 %s20, %s27
      %p160 = scmp.eq.s32.totalorder %s159, 0
      %s162 = sadd.s32 %s161, 1
      %s163 = scalar_select %p160, %s161, %s162
      %p166 = pneg %p160
      %p167 = scmp.eq.s32.totalorder %s20, 1
      %p168 = por %p166, %p167
      %p169 = scmp.ne.s32.totalorder %s161, %s164
      %p170 = scmp.eq.s32.totalorder %s20, 0
      %p171 = por %p169, %p170
      %p172 = scmp.ne.s32.totalorder %s161, %s164
      %p173 = scmp.eq.s32.totalorder %s25, 1
      %p174 = por %p172, %p173
      %p175 = scmp.ne.s32.totalorder %s164, %s165
      %p176 = scmp.eq.s32.totalorder %s25, 0
      %p177 = por %p175, %p176
      %p178 = scmp.ne.s32.totalorder %s164, %s165
      %p179 = scmp.eq.s32.totalorder %s26, 1
      %p180 = por %p178, %p179
      %p182 = scmp.ne.s32.totalorder %s165, %s181
      %p183 = scmp.eq.s32.totalorder %s26, 0
      %p184 = por %p182, %p183
      %p185 = scmp.le.s32.totalorder 1, %s20
      %p186 = scmp.lt.s32.totalorder %s20, 3
      %p187 = pnand %p185, %p186
      %p188 = pneg %p187
      // Predicated region
      $region9: #{tpu_custom_call.1} parent=5 // pred_check
        _
      $region10: #{tpu_custom_call.1} parent=5 // pred_check_branch
        %190 = sbr.rel (%p187) target = $region12
      $region11: #{tpu_custom_call.1} parent=5 // pred_region
        %s191 = ssub.s32 %s20, 1
        // Predicated region
        $region13: #{tpu_custom_call.1} parent=11 // pred_check
          %p192 = pneg %p67
        $region14: #{tpu_custom_call.1} parent=11 // pred_check_branch
          %194 = sbr.rel (%p192) target = $region16
        $region15: #{tpu_custom_call.1} parent=11 // pred_region
          %s196 = ssub.s32 512, 512
          %197 = vsyncadd [#allocation6], %s196
          %s198 = sshll.u32 [#allocation5], 4
          %s199 = int_to_ptr.vmem [resolvable:$true] %s198
          %204 = dma.hbm_to_vmem [thread:$0]  %s1, 512, %s199, [#allocation6], 128, 128, 8
        $region16: #{tpu_custom_call.1} parent=11 // pred_fallthru
          _
        // Predicated region
        $region17: #{tpu_custom_call.1} parent=11 // pred_check
          %p205 = pneg %p88
        $region18: #{tpu_custom_call.1} parent=11 // pred_check_branch
          %207 = sbr.rel (%p205) target = $region20
        $region19: #{tpu_custom_call.1} parent=11 // pred_region
          %s209 = ssub.s32 512, 512
          %210 = vsyncadd [#allocation6], %s209
          %s211 = sshll.u32 [#allocation7], 4
          %s212 = int_to_ptr.vmem [resolvable:$true] %s211
          %217 = dma.hbm_to_vmem [thread:$0]  %s2, 512, %s212, [#allocation6], 128, 128, 8
        $region20: #{tpu_custom_call.1} parent=11 // pred_fallthru
          _
        // Predicated region
        $region21: #{tpu_custom_call.1} parent=11 // pred_check
          %p218 = pneg %p109
        $region22: #{tpu_custom_call.1} parent=11 // pred_check_branch
          %220 = sbr.rel (%p218) target = $region24
        $region23: #{tpu_custom_call.1} parent=11 // pred_region
          _
        $region24: #{tpu_custom_call.1} parent=11 // pred_fallthru
          _
        // Predicated region
        $region25: #{tpu_custom_call.1} parent=11 // pred_check
          %p221 = pneg %p130
        $region26: #{tpu_custom_call.1} parent=11 // pred_check_branch
          %223 = sbr.rel (%p221) target = $region28
        $region27: #{tpu_custom_call.1} parent=11 // pred_region
          %s225 = ssub.s32 2048, 2048
          %226 = vsyncadd [#allocation9], %s225
          %s227 = sshll.u32 [#allocation8], 4
          %s228 = int_to_ptr.vmem [resolvable:$true] %s227
          %233 = dma.hbm_to_vmem [thread:$0]  %s4, 2048, %s228, [#allocation9], 128, 128, 8
        $region28: #{tpu_custom_call.1} parent=11 // pred_fallthru
          _
        // Predicated region
        $region29: #{tpu_custom_call.1} parent=11 // pred_check
          %p234 = pneg %p151
        $region30: #{tpu_custom_call.1} parent=11 // pred_check_branch
          %236 = sbr.rel (%p234) target = $region32
        $region31: #{tpu_custom_call.1} parent=11 // pred_region
          _
        $region32: #{tpu_custom_call.1} parent=11 // pred_fallthru
          _
      $region12: #{tpu_custom_call.1} parent=5 // pred_fallthru
        _
      %p237 = scmp.lt.s32.totalorder %s20, 2
      // Predicated region
      $region33: #{tpu_custom_call.1} parent=5 // pred_check
        %p238 = pneg %p237
      $region34: #{tpu_custom_call.1} parent=5 // pred_check_branch
        %240 = sbr.rel (%p238) target = $region36
      $region35: #{tpu_custom_call.1} parent=5 // pred_region
        // Predicated region
        $region37: #{tpu_custom_call.1} parent=35 // pred_check
          %p241 = pneg %p40
        $region38: #{tpu_custom_call.1} parent=35 // pred_check_branch
          %243 = sbr.rel (%p241) target = $region40
        $region39: #{tpu_custom_call.1} parent=35 // pred_region
          %s244 = sand.u32 %s30, 1
          %s245 = scalar_lea.sflag [#allocation3], %s244
          %s246 = sand.u32 %s30, 1
          %s247 = smul.addr %s246, 8
          %s248 = scalar_lea.vmem [#allocation2], %s247
          %s250 = ssub.s32 128, 128
          %251 = vsyncadd %s245, %s250
          %s252 = smul.addr %s20, 128
          %s253 = scalar_lea.hbm %s0, %s252
          %s255 = sshll.u32 %s248, 4
          %s256 = int_to_ptr.vmem [resolvable:$true] %s255
          %258 = dma.hbm_to_vmem [thread:$0]  %s253, 128, %s256, %s245
        $region40: #{tpu_custom_call.1} parent=35 // pred_fallthru
          _
      $region36: #{tpu_custom_call.1} parent=5 // pred_fallthru
        _
      %p259 = scmp.le.s32.totalorder 1, %s20
      %p260 = scmp.lt.s32.totalorder %s20, 3
      %p261 = pnand %p259, %p260
      %p262 = pneg %p261
      // Predicated region
      $region41: #{tpu_custom_call.1} parent=5 // pred_check
        _
      $region42: #{tpu_custom_call.1} parent=5 // pred_check_branch
        %264 = sbr.rel (%p261) target = $region44
      $region43: #{tpu_custom_call.1} parent=5 // pred_region
        %s265 = ssub.s32 %s20, 1
        %s266 = sand.u32 %s33, 1
        %s267 = scalar_lea.sflag [#allocation3], %s266
        %s268 = sand.u32 %s33, 1
        %s269 = smul.addr %s268, 8
        %s270 = scalar_lea.vmem [#allocation2], %s269
        // Predicated region
        $region45: #{tpu_custom_call.1} parent=43 // pred_check
          %p271 = pneg %p46
        $region46: #{tpu_custom_call.1} parent=43 // pred_check_branch
          %273 = sbr.rel (%p271) target = $region48
        $region47: #{tpu_custom_call.1} parent=43 // pred_region
          %274 = dma.done %s267, 128
        $region48: #{tpu_custom_call.1} parent=43 // pred_fallthru
          _
        // Predicated region
        $region49: #{tpu_custom_call.1} parent=43 // pred_check
          %p275 = pneg %p67
        $region50: #{tpu_custom_call.1} parent=43 // pred_check_branch
          %277 = sbr.rel (%p275) target = $region52
        $region51: #{tpu_custom_call.1} parent=43 // pred_region
          %278 = dma.done [#allocation6], 512
        $region52: #{tpu_custom_call.1} parent=43 // pred_fallthru
          _
        // Predicated region
        $region53: #{tpu_custom_call.1} parent=43 // pred_check
          %p279 = pneg %p88
        $region54: #{tpu_custom_call.1} parent=43 // pred_check_branch
          %281 = sbr.rel (%p279) target = $region56
        $region55: #{tpu_custom_call.1} parent=43 // pred_region
          %282 = dma.done [#allocation6], 512
        $region56: #{tpu_custom_call.1} parent=43 // pred_fallthru
          _
        // Predicated region
        $region57: #{tpu_custom_call.1} parent=43 // pred_check
          %p283 = pneg %p130
        $region58: #{tpu_custom_call.1} parent=43 // pred_check_branch
          %285 = sbr.rel (%p283) target = $region60
        $region59: #{tpu_custom_call.1} parent=43 // pred_region
          %286 = dma.done [#allocation9], 2048
        $region60: #{tpu_custom_call.1} parent=43 // pred_fallthru
          _
        %s287 = sand.u32 %s33, 1
        %s288 = scalar_lea.sflag [#allocation3], %s287
        %s289 = sand.u32 %s33, 1
        %s290 = smul.addr %s289, 8
        %s291 = scalar_lea.vmem [#allocation2], %s290
        %p292 = pneg %p46
        %p293 = pneg %p43
        %p294 = pneg %p67
        %p295 = pneg %p64
        %p296 = pneg %p88
        %p297 = pneg %p85
        %p298 = pneg %p109
        %p299 = pneg %p106
        %p300 = pneg %p130
        %p301 = pneg %p127
        %p302 = pneg %p151
        %p303 = pneg %p148
        %p304 = pneg %p177
        %p305 = pneg %p174
        %s306 = sand.u32 %s164, 1
        %s307 = scalar_lea.sflag [#allocation4], %s306
        %s308 = sand.u32 %s164, 1
        %s309 = smul.addr %s308, 8
        %s310 = scalar_lea.vmem [#allocation10], %s309
        %v311 = vld [vmem:[%s270] sm:$0xff]
        %v312 = vld [vmem:[#allocation5] sm:$0xff]
        %v313 = vld [vmem:[#allocation5 + $0x8] sm:$0xff]
        %v314 = vld [vmem:[#allocation5 + $0x10] sm:$0xff]
        %v315 = vld [vmem:[#allocation5 + $0x18] sm:$0xff]
        %v316 = vld [vmem:[%s3] sm:$0x1]
        %v318 = vlaneseq
        %v319 = vshrl.u32 %v318, 7
        %v320 = vsub.s32 0, %v319
        %v321 = vrot.slane %v316, %v320
        %vm323 = vcmask 261120
        %v325 = vsel %vm323, %v311, 0
        %327 = vmatprep.subr.mxu0 0.0
        %328 = vmatpush1.msra.mxu0 %v312
        %329 = vmatprep.subr.mxu0 0.0
        %330 = vmatpush1.msra.mxu0 %v313
        %331 = vmatprep.subr.mxu0 0.0
        %332 = vmatpush1.msra.mxu0 %v314
        %333 = vmatprep.subr.mxu0 0.0
        %334 = vmatpush1.msra.mxu0 %v315
        %335 = vmatprep.subr.mxu0 0.0
        %336 = vmatpush1.msra.mxu0 0.0
        %337 = vmatprep.subr.mxu0 0.0
        %338 = vmatpush1.msra.mxu0 0.0
        %339 = vmatprep.subr.mxu0 0.0
        %340 = vmatpush1.msra.mxu0 0.0
        %341 = vmatprep.subr.mxu0 0.0
        %342 = vmatpush1.msra.mxu0 0.0
        %343 = vmatprep.subr.mxu0 0.0
        %344 = vmatpush1.msra.mxu0 0.0
        %345 = vmatprep.subr.mxu0 0.0
        %346 = vmatpush1.msra.mxu0 0.0
        %347 = vmatprep.subr.mxu0 0.0
        %348 = vmatpush1.msra.mxu0 0.0
        %349 = vmatprep.subr.mxu0 0.0
        %350 = vmatpush1.msra.mxu0 0.0
        %351 = vmatprep.subr.mxu0 0.0
        %352 = vmatpush1.msra.mxu0 0.0
        %353 = vmatprep.subr.mxu0 0.0
        %354 = vmatpush1.msra.mxu0 0.0
        %355 = vmatprep.subr.mxu0 0.0
        %356 = vmatpush1.msra.mxu0 0.0
        %357 = vmatprep.subr.mxu0 0.0
        %358 = vmatpush1.msra.mxu0 0.0
        %359 = vmatprep.subr.mxu0 0.0
        %360 = vmatpush1.msra.mxu0 0.0
        %361 = vmatprep.subr.mxu0 0.0
        %362 = vmatpush1.msra.mxu0 0.0
        %363 = vmatprep.subr.mxu0 0.0
        %364 = vmatpush1.msra.mxu0 0.0
        %365 = vmatprep.subr.mxu0 0.0
        %366 = vmatpush1.msra.mxu0 0.0
        %367 = vmatprep.subr.mxu0 0.0
        %368 = vmatpush1.msra.mxu0 0.0
        %369 = vmatprep.subr.mxu0 0.0
        %370 = vmatpush1.msra.mxu0 0.0
        %371 = vmatprep.subr.mxu0 0.0
        %372 = vmatpush1.msra.mxu0 0.0
        %373 = vmatprep.subr.mxu0 0.0
        %374 = vmatpush1.msra.mxu0 0.0
        %375 = vmatprep.subr.mxu0 0.0
        %376 = vmatpush1.msra.mxu0 0.0
        %377 = vmatprep.subr.mxu0 0.0
        %378 = vmatpush1.msra.mxu0 0.0
        %379 = vmatprep.subr.mxu0 0.0
        %380 = vmatpush1.msra.mxu0 0.0
        %381 = vmatprep.subr.mxu0 0.0
        %382 = vmatpush1.msra.mxu0 0.0
        %383 = vmatprep.subr.mxu0 0.0
        %384 = vmatpush1.msra.mxu0 0.0
        %385 = vmatprep.subr.mxu0 0.0
        %386 = vmatpush1.msra.mxu0 0.0
        %387 = vmatprep.subr.mxu0 0.0
        %388 = vmatpush1.msra.mxu0 0.0
        %389 = vmatprep.subr.mxu0 0.0
        %390 = vmatpush1.msra.mxu0 0.0
        %391 = vmatprep.mubr.f32.mxu0 0.0
        %392 = vmatmul.mubr.f32.gmra.mrb[0].mxu0 %v325
        %v393 = vpop.f32.mrb[0].mxu0
        %v394 = vadd.f32 %v321, %v393
        %v395 = vpop.f32.mrb[0].mxu0
        %396 = vdwg.mxu0
        %v397 = vmax.f32 %v394, 0.0
        %v398 = vld [vmem:[#allocation7] sm:$0xff]
        %v399 = vld [vmem:[#allocation7 + $0x8] sm:$0xff]
        %v400 = vld [vmem:[#allocation7 + $0x10] sm:$0xff]
        %v401 = vld [vmem:[#allocation7 + $0x18] sm:$0xff]
        %v402 = vld [vmem:[#allocation8] sm:$0xff]
        %v403 = vld [vmem:[#allocation8 + $0x8] sm:$0xff]
        %v404 = vld [vmem:[#allocation8 + $0x10] sm:$0xff]
        %v405 = vld [vmem:[#allocation8 + $0x18] sm:$0xff]
        %v406 = vld [vmem:[#allocation8 + $0x20] sm:$0xff]
        %v407 = vld [vmem:[#allocation8 + $0x28] sm:$0xff]
        %v408 = vld [vmem:[#allocation8 + $0x30] sm:$0xff]
        %v409 = vld [vmem:[#allocation8 + $0x38] sm:$0xff]
        %v410 = vld [vmem:[#allocation8 + $0x40] sm:$0xff]
        %v411 = vld [vmem:[#allocation8 + $0x48] sm:$0xff]
        %v412 = vld [vmem:[#allocation8 + $0x50] sm:$0xff]
        %v413 = vld [vmem:[#allocation8 + $0x58] sm:$0xff]
        %v414 = vld [vmem:[#allocation8 + $0x60] sm:$0xff]
        %v415 = vld [vmem:[#allocation8 + $0x68] sm:$0xff]
        %v416 = vld [vmem:[#allocation8 + $0x70] sm:$0xff]
        %v417 = vld [vmem:[#allocation8 + $0x78] sm:$0xff]
        %418 = vmatprep.subr.mxu0 0.0
        %419 = vmatpush1.msra.mxu0 %v402
        %420 = vmatprep.subr.mxu0 0.0
        %421 = vmatpush1.msra.mxu0 %v403
        %422 = vmatprep.subr.mxu0 0.0
        %423 = vmatpush1.msra.mxu0 %v404
        %424 = vmatprep.subr.mxu0 0.0
        %425 = vmatpush1.msra.mxu0 %v405
        %426 = vmatprep.subr.mxu0 0.0
        %427 = vmatpush1.msra.mxu0 %v406
        %428 = vmatprep.subr.mxu0 0.0
        %429 = vmatpush1.msra.mxu0 %v407
        %430 = vmatprep.subr.mxu0 0.0
        %431 = vmatpush1.msra.mxu0 %v408
        %432 = vmatprep.subr.mxu0 0.0
        %433 = vmatpush1.msra.mxu0 %v409
        %434 = vmatprep.subr.mxu0 0.0
        %435 = vmatpush1.msra.mxu0 %v410
        %436 = vmatprep.subr.mxu0 0.0
        %437 = vmatpush1.msra.mxu0 %v411
        %438 = vmatprep.subr.mxu0 0.0
        %439 = vmatpush1.msra.mxu0 %v412
        %440 = vmatprep.subr.mxu0 0.0
        %441 = vmatpush1.msra.mxu0 %v413
        %442 = vmatprep.subr.mxu0 0.0
        %443 = vmatpush1.msra.mxu0 %v414
        %444 = vmatprep.subr.mxu0 0.0
        %445 = vmatpush1.msra.mxu0 %v415
        %446 = vmatprep.subr.mxu0 0.0
        %447 = vmatpush1.msra.mxu0 %v416
        %448 = vmatprep.subr.mxu0 0.0
        %449 = vmatpush1.msra.mxu0 %v417
        %450 = vmatprep.subr.mxu0 0.0
        %451 = vmatpush1.msra.mxu0 0.0
        %452 = vmatprep.subr.mxu0 0.0
        %453 = vmatpush1.msra.mxu0 0.0
        %454 = vmatprep.subr.mxu0 0.0
        %455 = vmatpush1.msra.mxu0 0.0
        %456 = vmatprep.subr.mxu0 0.0
        %457 = vmatpush1.msra.mxu0 0.0
        %458 = vmatprep.subr.mxu0 0.0
        %459 = vmatpush1.msra.mxu0 0.0
        %460 = vmatprep.subr.mxu0 0.0
        %461 = vmatpush1.msra.mxu0 0.0
        %462 = vmatprep.subr.mxu0 0.0
        %463 = vmatpush1.msra.mxu0 0.0
        %464 = vmatprep.subr.mxu0 0.0
        %465 = vmatpush1.msra.mxu0 0.0
        %466 = vmatprep.subr.mxu0 0.0
        %467 = vmatpush1.msra.mxu0 0.0
        %468 = vmatprep.subr.mxu0 0.0
        %469 = vmatpush1.msra.mxu0 0.0
        %470 = vmatprep.subr.mxu0 0.0
        %471 = vmatpush1.msra.mxu0 0.0
        %472 = vmatprep.subr.mxu0 0.0
        %473 = vmatpush1.msra.mxu0 0.0
        %474 = vmatprep.subr.mxu0 0.0
        %475 = vmatpush1.msra.mxu0 0.0
        %476 = vmatprep.subr.mxu0 0.0
        %477 = vmatpush1.msra.mxu0 0.0
        %478 = vmatprep.subr.mxu0 0.0
        %479 = vmatpush1.msra.mxu0 0.0
        %480 = vmatprep.subr.mxu0 0.0
        %481 = vmatpush1.msra.mxu0 0.0
        %482 = vmatprep.mubr.f32.mxu0 0.0
        %483 = vmatmul.mubr.f32.gmra.mrb[0].mxu0 %v397
        %v484 = vpop.f32.mrb[0].mxu0
        %v485 = vadd.f32 0.0, %v484
        %v486 = vpop.f32.mrb[0].mxu0
        %487 = vdwg.mxu0
        %488 = vmatprep.subr.mxu0 0.0
        %489 = vmatpush1.msra.mxu0 %v398
        %490 = vmatprep.subr.mxu0 0.0
        %491 = vmatpush1.msra.mxu0 %v399
        %492 = vmatprep.subr.mxu0 0.0
        %493 = vmatpush1.msra.mxu0 %v400
        %494 = vmatprep.subr.mxu0 0.0
        %495 = vmatpush1.msra.mxu0 %v401
        %496 = vmatprep.subr.mxu0 0.0
        %497 = vmatpush1.msra.mxu0 0.0
        %498 = vmatprep.subr.mxu0 0.0
        %499 = vmatpush1.msra.mxu0 0.0
        %500 = vmatprep.subr.mxu0 0.0
        %501 = vmatpush1.msra.mxu0 0.0
        %502 = vmatprep.subr.mxu0 0.0
        %503 = vmatpush1.msra.mxu0 0.0
        %504 = vmatprep.subr.mxu0 0.0
        %505 = vmatpush1.msra.mxu0 0.0
        %506 = vmatprep.subr.mxu0 0.0
        %507 = vmatpush1.msra.mxu0 0.0
        %508 = vmatprep.subr.mxu0 0.0
        %509 = vmatpush1.msra.mxu0 0.0
        %510 = vmatprep.subr.mxu0 0.0
        %511 = vmatpush1.msra.mxu0 0.0
        %512 = vmatprep.subr.mxu0 0.0
        %513 = vmatpush1.msra.mxu0 0.0
        %514 = vmatprep.subr.mxu0 0.0
        %515 = vmatpush1.msra.mxu0 0.0
        %516 = vmatprep.subr.mxu0 0.0
        %517 = vmatpush1.msra.mxu0 0.0
        %518 = vmatprep.subr.mxu0 0.0
        %519 = vmatpush1.msra.mxu0 0.0
        %520 = vmatprep.subr.mxu0 0.0
        %521 = vmatpush1.msra.mxu0 0.0
        %522 = vmatprep.subr.mxu0 0.0
        %523 = vmatpush1.msra.mxu0 0.0
        %524 = vmatprep.subr.mxu0 0.0
        %525 = vmatpush1.msra.mxu0 0.0
        %526 = vmatprep.subr.mxu0 0.0
        %527 = vmatpush1.msra.mxu0 0.0
        %528 = vmatprep.subr.mxu0 0.0
        %529 = vmatpush1.msra.mxu0 0.0
        %530 = vmatprep.subr.mxu0 0.0
        %531 = vmatpush1.msra.mxu0 0.0
        %532 = vmatprep.subr.mxu0 0.0
        %533 = vmatpush1.msra.mxu0 0.0
        %534 = vmatprep.subr.mxu0 0.0
        %535 = vmatpush1.msra.mxu0 0.0
        %536 = vmatprep.subr.mxu0 0.0
        %537 = vmatpush1.msra.mxu0 0.0
        %538 = vmatprep.subr.mxu0 0.0
        %539 = vmatpush1.msra.mxu0 0.0
        %540 = vmatprep.subr.mxu0 0.0
        %541 = vmatpush1.msra.mxu0 0.0
        %542 = vmatprep.subr.mxu0 0.0
        %543 = vmatpush1.msra.mxu0 0.0
        %544 = vmatprep.subr.mxu0 0.0
        %545 = vmatpush1.msra.mxu0 0.0
        %546 = vmatprep.subr.mxu0 0.0
        %547 = vmatpush1.msra.mxu0 0.0
        %548 = vmatprep.subr.mxu0 0.0
        %549 = vmatpush1.msra.mxu0 0.0
        %550 = vmatprep.subr.mxu0 0.0
        %551 = vmatpush1.msra.mxu0 0.0
        %552 = vmatprep.mubr.f32.mxu0 0.0
        %553 = vmatmul.mubr.f32.gmra.mrb[0].mxu0 %v325
        %v554 = vpop.f32.mrb[0].mxu0
        %v555 = vadd.f32 %v485, %v554
        %v556 = vpop.f32.mrb[0].mxu0
        %557 = vdwg.mxu0
        %v558 = vld [vmem:[%s5] sm:$0x1]
        %v560 = vlaneseq
        %v561 = vshrl.u32 %v560, 7
        %v562 = vsub.s32 0, %v561
        %v563 = vrot.slane %v558, %v562
        %v565 = vadd.f32 %v555, %v563
        %v566 = vmax.f32 %v565, 0.0
        %567 = vst [vmem:[%s310] sm:$0xff] %v566
        %s568 = sand.u32 %s164, 1
        %s569 = scalar_lea.sflag [#allocation4], %s568
        %s570 = sand.u32 %s164, 1
        %s571 = smul.addr %s570, 8
        %s572 = scalar_lea.vmem [#allocation10], %s571
        // Predicated region
        $region61: #{tpu_custom_call.1} parent=43 // pred_check
          %p573 = pneg %p174
        $region62: #{tpu_custom_call.1} parent=43 // pred_check_branch
          %575 = sbr.rel (%p573) target = $region64
        $region63: #{tpu_custom_call.1} parent=43 // pred_region
          %s577 = ssub.s32 128, 128
          %578 = vsyncadd %s569, %s577
          %s579 = smul.addr %s25, 128
          %s580 = scalar_lea.hbm %s6, %s579
          %s582 = sshll.u32 %s572, 4
          %s583 = int_to_ptr.vmem [resolvable:$true] %s582
          %585 = dma.vmem_to_hbm [thread:$0]  %s583, 128, %s580, %s569
        $region64: #{tpu_custom_call.1} parent=43 // pred_fallthru
          _
      $region44: #{tpu_custom_call.1} parent=5 // pred_fallthru
        _
      %p586 = scmp.le.s32.totalorder 2, %s20
      // Predicated region
      $region65: #{tpu_custom_call.1} parent=5 // pred_check
        %p587 = pneg %p586
      $region66: #{tpu_custom_call.1} parent=5 // pred_check_branch
        %589 = sbr.rel (%p587) target = $region68
      $region67: #{tpu_custom_call.1} parent=5 // pred_region
        %s590 = ssub.s32 %s20, 2
        // Predicated region
        $region69: #{tpu_custom_call.1} parent=67 // pred_check
          %p591 = pneg %p180
        $region70: #{tpu_custom_call.1} parent=67 // pred_check_branch
          %593 = sbr.rel (%p591) target = $region72
        $region71: #{tpu_custom_call.1} parent=67 // pred_region
          %s594 = sand.u32 %s165, 1
          %s595 = scalar_lea.sflag [#allocation4], %s594
          %s596 = sand.u32 %s165, 1
          %s597 = smul.addr %s596, 8
          %s598 = scalar_lea.vmem [#allocation10], %s597
          %599 = dma.done %s595, 128
        $region72: #{tpu_custom_call.1} parent=67 // pred_fallthru
          _
      $region68: #{tpu_custom_call.1} parent=5 // pred_fallthru
        _
    $region6: #{tpu_custom_call.1} parent=1 // loop_footer
      %s24 = sadd.s32 1, %s20
    $region7: #{tpu_custom_call.1} parent=1 // loop_footer_branch
      %19 = sbr.rel target = $region3
    $region8: #{tpu_custom_call.1} parent=1 // loop_exit
      _
    %600 = vsyncpa [#allocation3], 1
    %s601 = scalar_lea.sflag [#allocation3], 1
    %602 = vsyncpa %s601, 1
    %603 = vsyncpa [#allocation6], 1
    %604 = vsyncpa [#allocation9], 1
    %605 = vsyncpa [#allocation4], 1
    %s606 = scalar_lea.sflag [#allocation4], 1
    %607 = vsyncpa %s606, 1

</llo_original>
